<compile_context>
chip_gen: v7x
topology: tpu7x:2x2x1
jax: 0.10.0
libtpu: 0.0.40
codegen_flags: <defaults>
</compile_context>

<pallas_src>
import jax
import jax.numpy as jnp
import numpy as np
from jax.experimental import pallas as pl
from jax.experimental.pallas import tpu as pltpu


def _compute_seps(nchannels: int, nparts: int):
    """Mirror of the PyTorch __init__ separator computation."""
    nlocal_norm = nchannels // nparts
    reminder = nchannels % nparts
    nlocal_last = nlocal_norm + reminder if reminder != 0 else nlocal_norm
    seps = []
    sep_node = 0
    for i in range(nparts):
        sep_node += nlocal_norm if i != nparts - 1 else nlocal_last
        seps.append(sep_node)
    return seps


def _build_weight_matrix(nchannels: int, nparts: int, batch: int, seps):
    """Static (C, C) f32 weights W such that

        loss = rho * 0.5 * (1 + sum_{b,r,c} x[b,r,c]^2 * W[r,c])

    W = -1/(B*blk^2*nparts) inside each diagonal block,
        +1/(B*blk*lo*denom)  inside each lower off-diagonal block, 0 elsewhere.
    """
    w = np.zeros((nchannels, nchannels), dtype=np.float32)
    denom_inter = nparts * (nparts - 1) / 2.0
    prev = 0
    for i in range(nparts):
        lo, hi = prev, seps[i]
        blk = hi - lo
        w[lo:hi, lo:hi] = -1.0 / (batch * blk * blk * nparts)
        if i > 0:
            w[lo:hi, :lo] = 1.0 / (batch * blk * lo * denom_inter)
        prev = hi
    return jnp.asarray(w)


def _vmem_budget():
    """(combined per-step block byte target, vmem_limit_bytes), per chip gen."""
    try:
        cap = getattr(pltpu.get_tpu_info(), "vmem_capacity_bytes", None)
    except Exception:  # pragma: no cover - defensive, fall back to safe sizes
        cap = None
    if cap is not None and cap >= 96 * 1024 * 1024:
        # v5e / v6e: 128 MiB physical VMEM -> bigger blocks, higher limit.
        return 8 * 1024 * 1024, 64 * 1024 * 1024
    # v7x (64 MiB physical / 32 MiB scoped default) or unknown: conservative.
    return 4 * 1024 * 1024, 32 * 1024 * 1024


def _choose_tiles(batch, nchannels, itemsize, target_bytes,
                  row_tile=None, batch_tile=None):
    """Pick (tb, tr): tb divides B, tr divides C with tr % 8 == 0 or tr == C.

    The *combined* per-step footprint tb*tr*C*itemsize (x) + tr*C*4 (f32 W)
    is kept under target_bytes (double-buffering handled by the caller's
    vmem limit headroom)."""
    c = nchannels
    x_row = c * itemsize
    w_row = c * 4

    # --- row tile ---
    if row_tile is not None:
        tr = row_tile
    else:
        if c % 8 != 0 or c * (x_row + w_row) <= target_bytes:
            tr = c  # full-extent rows (always layout-legal)
        else:
            tr = max(8, min(c, (target_bytes // (x_row + w_row)) // 8 * 8))
            while c % tr != 0:
                tr -= 8
            tr = max(tr, 8)
    assert c % tr == 0 and (tr % 8 == 0 or tr == c), (tr, c)
    num_tiles = c // tr

    # --- batch tile ---
    if batch_tile is not None:
        tb = batch_tile
    else:
        budget_left = max(target_bytes - tr * w_row, tr * x_row)
        max_tb = max(1, budget_left // (tr * x_row))
        if num_tiles == 1 and batch >= 2:
            # Keep >= 2 grid steps so a v7x megacore split has work on both
            # TensorCores even when a single row tile covers all of C.
            max_tb = min(max_tb, max(1, batch // 2))
        tb = 1
        for d in range(1, batch + 1):
            if batch % d == 0 and d <= max_tb:
                tb = d
    assert batch % tb == 0, (tb, batch)
    return tb, tr


def _lmgm_tile_kernel(x_ref, w_ref, o_ref):
    # x_ref: (tb, tr, C) block of the input (cast to f32 per block).
    # w_ref: (tr, C) block of the static f32 weight matrix.
    xf = x_ref[...].astype(jnp.float32)
    sq = jnp.sum(xf * xf, axis=0)                 # reduce batch first (VPU only)
    partial = jnp.sum(sq * w_ref[...])            # single full reduce per step
    o_ref[...] = jnp.full((1, 1), partial, dtype=jnp.float32)


def local_max_global_min(x, *, rho, nparts, row_tile=None, batch_tile=None):
    """x: (B, C, C) array. Returns the scalar loss (float32)."""
    b, c, c2 = x.shape
    assert c == c2, "expected a square channel-correlation matrix"
    if nparts < 2:
        # Same hazard as the PyTorch module (division by zero for nparts == 1).
        raise ValueError("nparts must be >= 2 (PyTorch forward divides by "
                         "nparts*(nparts-1)/2)")

    seps = _compute_seps(c, nparts)
    w = _build_weight_matrix(c, nparts, b, seps)

    target_bytes, vmem_limit = _vmem_budget()
    itemsize = jnp.dtype(x.dtype).itemsize
    tb, tr = _choose_tiles(b, c, itemsize, target_bytes,
                           row_tile=row_tile, batch_tile=batch_tile)
    num_tiles = c // tr
    num_btiles = b // tb

    partials = pl.pallas_call(
        _lmgm_tile_kernel,
        out_shape=jax.ShapeDtypeStruct((num_tiles, num_btiles, 1, 1),
                                       jnp.float32),
        # Grid: row tiles outer, batch blocks inner -> W's block index is
        # constant across the inner axis and W is only fetched once per tile.
        grid=(num_tiles, num_btiles),
        in_specs=[
            pl.BlockSpec((tb, tr, c), lambda t, bb: (bb, t, 0)),
            pl.BlockSpec((tr, c), lambda t, bb: (t, 0)),
        ],
        # 4-D output so the block's last two dims equal the full array dims.
        out_specs=pl.BlockSpec((None, None, 1, 1),
                               lambda t, bb: (t, bb, 0, 0)),
        compiler_params=pltpu.CompilerParams(
            dimension_semantics=("parallel", "parallel"),
            vmem_limit_bytes=vmem_limit,
        ),
    )(x, w)

    # Tiny final combine in the wrapper (a handful of partials).
    return rho * 0.5 * (1.0 + jnp.sum(partials))


def _reference(x, *, rho, nparts):
    """Plain-JAX re-implementation of the PyTorch forward (for validation)."""
    seps = _compute_seps(x.shape[1], nparts)
    x2 = (x.astype(jnp.float32)) ** 2
    intra, inter = [], []
    prev = 0
    for i in range(nparts):
        lo, hi = prev, seps[i]
        intra.append(jnp.mean(1.0 - x2[:, lo:hi, lo:hi]))
        if i > 0:
            inter.append(jnp.mean(x2[:, lo:hi, :lo]))
        prev = hi
    return rho * 0.5 * (sum(intra) / nparts
                        + sum(inter) / (nparts * (nparts - 1) / 2))


if __name__ == "__main__":
    rho = 0.5
    key = jax.random.PRNGKey(0)

    # Test 1: small shape matching the module defaults (B=2, C=8, nparts=2).
    x1 = jax.random.normal(key, (2, 8, 8), dtype=jnp.float32)
    out1 = jax.block_until_ready(local_max_global_min(x1, rho=rho, nparts=2))
    ref1 = jax.block_until_ready(_reference(x1, rho=rho, nparts=2))
    assert jnp.allclose(out1, ref1, atol=1e-5, rtol=1e-5), (out1, ref1)

    # Test 2: exercises the multi-row-tile grid path plus batch blocking
    # (tb=2) and an uneven last part (C % nparts != 0).
    x2 = jax.random.normal(jax.random.PRNGKey(0), (2, 64, 64), dtype=jnp.float32)
    out2 = jax.block_until_ready(
        local_max_global_min(x2, rho=rho, nparts=3, row_tile=8))
    ref2 = jax.block_until_ready(_reference(x2, rho=rho, nparts=3))
    assert jnp.allclose(out2, ref2, atol=1e-5, rtol=1e-5), (out2, ref2)

    # Test 3: bf16 input path (halved DMA bytes; per-block cast to f32,
    # itemsize-aware tile choice).
    x3 = x2.astype(jnp.bfloat16)
    out3 = jax.block_until_ready(local_max_global_min(x3, rho=rho, nparts=4))
    ref3 = jax.block_until_ready(_reference(x3, rho=rho, nparts=4))
    assert jnp.allclose(out3, ref3, atol=1e-4, rtol=1e-3), (out3, ref3)

    print("KERNEL_OK")
</pallas_src>

<mosaic_0001>
module attributes {stable_mosaic.version = 11 : i64} {
  func.func @_lmgm_tile_kernel(%arg0: i32, %arg1: i32, %arg2: memref<1x8x8xf32, #tpu.memory_space<vmem>>, %arg3: memref<8x8xf32, #tpu.memory_space<vmem>>, %arg4: memref<1x1x1x1xf32, #tpu.memory_space<vmem>>) attributes {dimension_semantics = [#tpu.dimension_semantics<parallel>, #tpu.dimension_semantics<parallel>], iteration_bounds = array<i64: 1, 2>, scalar_prefetch = 0 : i64, scratch_operands = 0 : i64, tpu.core_type = #tpu.core_type<tc>, window_params = [{transform_indices = @transform_0, window_bounds = array<i64: 1, 8, 8>}, {transform_indices = @transform_1, window_bounds = array<i64: 8, 8>}, {transform_indices = @transform_2, window_bounds = array<i64: 1, 1, 1, 1>}]} {
    %c0 = arith.constant 0 : index
    %c0_0 = arith.constant 0 : index
    %c0_1 = arith.constant 0 : index
    %0 = vector.load %arg2[%c0, %c0_0, %c0_1] : memref<1x8x8xf32, #tpu.memory_space<vmem>>, vector<1x8x8xf32>
    %1 = arith.mulf %0, %0 : vector<1x8x8xf32>
    %cst = arith.constant dense<0.000000e+00> : vector<8x8xf32>
    %2 = vector.multi_reduction <add>, %1, %cst [0] : vector<1x8x8xf32> to vector<8x8xf32>
    %c0_2 = arith.constant 0 : index
    %c0_3 = arith.constant 0 : index
    %3 = vector.load %arg3[%c0_2, %c0_3] : memref<8x8xf32, #tpu.memory_space<vmem>>, vector<8x8xf32>
    %4 = arith.mulf %2, %3 : vector<8x8xf32>
    %5 = vector.shape_cast %4 : vector<8x8xf32> to vector<1x8x8xf32>
    %cst_4 = arith.constant dense<0.000000e+00> : vector<1xf32>
    %6 = vector.multi_reduction <add>, %5, %cst_4 [1, 2] : vector<1x8x8xf32> to vector<1xf32>
    %7 = vector.shape_cast %6 : vector<1xf32> to vector<1x1x1xf32>
    %8 = vector.extract %7[0, 0, 0] : f32 from vector<1x1x1xf32>
    %9 = vector.broadcast %8 : f32 to vector<1x1xf32>
    %c0_5 = arith.constant 0 : index
    %c0_6 = arith.constant 0 : index
    %c0_7 = arith.constant 0 : index
    %c0_8 = arith.constant 0 : index
    %10 = vector.load %arg4[%c0_5, %c0_6, %c0_7, %c0_8] : memref<1x1x1x1xf32, #tpu.memory_space<vmem>>, vector<1x1x1x1xf32>
    %11 = vector.shape_cast %10 : vector<1x1x1x1xf32> to vector<1x1xf32>
    %12 = vector.shape_cast %9 : vector<1x1xf32> to vector<1x1x1x1xf32>
    tpu.vector_store %arg4[%c0_5, %c0_6, %c0_7, %c0_8], %12 {strides = array<i32>} : memref<1x1x1x1xf32, #tpu.memory_space<vmem>>, vector<1x1x1x1xf32>,
    return
  }
  func.func @transform_0(%arg0: i32, %arg1: i32) -> (i32, i32, i32) {
    %c0_i32 = arith.constant 0 : i32
    %c0_i32_0 = arith.constant 0 : i32
    return %arg1, %arg0, %c0_i32 : i32, i32, i32
  }
  func.func @transform_1(%arg0: i32, %arg1: i32) -> (i32, i32) {
    %c0_i32 = arith.constant 0 : i32
    %c0_i32_0 = arith.constant 0 : i32
    return %arg0, %c0_i32 : i32, i32
  }
  func.func @transform_2(%arg0: i32, %arg1: i32) -> (i32, i32, i32, i32) {
    %c0_i32 = arith.constant 0 : i32
    %c0_i32_0 = arith.constant 0 : i32
    %c0_i32_1 = arith.constant 0 : i32
    return %arg0, %arg1, %c0_i32, %c0_i32_0 : i32, i32, i32, i32
  }
}

</mosaic_0001>

<llo_original>
// kernel: tpu_custom_call.1
$region0: #{tpu_custom_call.1}
  #allocation0 [shape = 'u32[]', space=smem, size = 0x4, offset = 0x4, fixed_abs, tag = 'smem constant byte address 0x4 - core index']
  #allocation1 [shape = 'u32[144,128]{1,0:T(1,128)}', space=vmem, size = 0x12000, scoped, tag = 'internal scratch']
  %s0 = inlined_call_operand.hbm [shape: f32[2,8,8], index: 0, kind: input, shape index: {}]
  %s1 = inlined_call_operand.hbm [shape: f32[8,8], index: 1, kind: input, shape index: {}]
  %s2 = inlined_call_operand.vmem [shape: f32[1,2,1,1], index: 2, kind: output, shape index: {}]
  %s3 = sld [smem:[#allocation0]]
  $region49: #{tpu_custom_call.1} parent=0
    _
  %s5 = ssub.s32 1, %s3
  %s6 = scalar_select 0, %s5, %s3
  $region1: #{tpu_custom_call.1} parent=0
    #allocation2 [shape = 'u8[8192]{0}', space=vmem, size = 0x2000, scoped, tag = 'input window, operand 0']
    #allocation3 [shape = 's32[2]{0}', space=sflag, size = 0x8, scoped, tag = 'scoped memory for tpu_custom_call.1']
    #allocation4 [shape = 'u8[4096]{0}', space=vmem, size = 0x1000, scoped, tag = 'input window, operand 1, single buffered']
    #allocation5 [shape = 's32[1]{0}', space=sflag, size = 0x4, scoped, tag = 'scoped memory for tpu_custom_call.1']
    %7 = vsyncpa [#allocation3], 0
    %s8 = scalar_lea.sflag [#allocation3], 1
    %9 = vsyncpa %s8, 0
    %10 = vsyncpa [#allocation5], 0
    loop: start=0, step=1, limit=4
    $region2: #{tpu_custom_call.1} parent=1 // loop_pre_header
      _
    $region3: #{tpu_custom_call.1} parent=1 // loop_header
      %s12 = sphi 0, %s16
      %p13 = scmp.ge.s32.totalorder %s12, 4
      %s19 = sphi 0, %s31
      %s20 = sphi 0, %s27
      %s21 = sphi 0, %s19
      %s22 = sphi 0, %s20
      %s23 = sphi 0, %s21
      %s24 = sphi 0, %s22
      %s36 = sphi 0, %s38
      %s39 = sphi 0, %s36
      %s40 = sphi 0, %s39
      %s56 = sphi 0, %s40
      %s62 = sphi 0, %s64
      %s65 = sphi 0, %s62
      %s66 = sphi 0, %s65
      %s82 = sphi 0, %s66
      %s90 = sphi 0, %s92
      %s93 = sphi 0, %s90
      %s94 = sphi 0, %s93
      %s110 = sphi 0, %s94
    $region4: #{tpu_custom_call.1} parent=1 // loop_header_branch
      %15 = sbr.rel (%p13) target = $region8
    $region5: #{tpu_custom_call.1} parent=1 // loop_body
      %s17 = ssub.s32 %s12, 1
      %s18 = ssub.s32 %s12, 2
      %s25 = sadd.s32 1, %s20
      %p26 = scmp.ge.s32.totalorder %s25, 2
      %s27 = scalar_select %p26, 0, %s25
      %s28 = sadd.s32 1, %s19
      %s29 = scalar_select %p26, %s28, %s19
      %p30 = scmp.ge.s32.totalorder %s29, 1
      %s31 = scalar_select %p30, 0, %s29
      %s32 = ssub.s32 %s20, %s27
      %s33 = ssub.s32 %s19, %s31
      %s34 = sor.u32 %s32, %s33
      %p35 = scmp.eq.s32.totalorder %s34, 0
      %s37 = sadd.s32 %s36, 1
      %s38 = scalar_select %p35, %s36, %s37
      %p41 = pneg %p35
      %p42 = scmp.eq.s32.totalorder %s12, 1
      %p43 = por %p41, %p42
      %p44 = scmp.ne.s32.totalorder %s36, %s39
      %p45 = scmp.eq.s32.totalorder %s12, 0
      %p46 = por %p44, %p45
      %p47 = scmp.ne.s32.totalorder %s36, %s39
      %p48 = scmp.eq.s32.totalorder %s17, 1
      %p49 = por %p47, %p48
      %p50 = scmp.ne.s32.totalorder %s39, %s40
      %p51 = scmp.eq.s32.totalorder %s17, 0
      %p52 = por %p50, %p51
      %p53 = scmp.ne.s32.totalorder %s39, %s40
      %p54 = scmp.eq.s32.totalorder %s18, 1
      %p55 = por %p53, %p54
      %p57 = scmp.ne.s32.totalorder %s40, %s56
      %p58 = scmp.eq.s32.totalorder %s18, 0
      %p59 = por %p57, %p58
      %s60 = ssub.s32 %s19, %s31
      %p61 = scmp.eq.s32.totalorder %s60, 0
      %s63 = sadd.s32 %s62, 1
      %s64 = scalar_select %p61, %s62, %s63
      %p67 = pneg %p61
      %p68 = scmp.eq.s32.totalorder %s12, 1
      %p69 = por %p67, %p68
      %p70 = scmp.ne.s32.totalorder %s62, %s65
      %p71 = scmp.eq.s32.totalorder %s12, 0
      %p72 = por %p70, %p71
      %p73 = scmp.ne.s32.totalorder %s62, %s65
      %p74 = scmp.eq.s32.totalorder %s17, 1
      %p75 = por %p73, %p74
      %p76 = scmp.ne.s32.totalorder %s65, %s66
      %p77 = scmp.eq.s32.totalorder %s17, 0
      %p78 = por %p76, %p77
      %p79 = scmp.ne.s32.totalorder %s65, %s66
      %p80 = scmp.eq.s32.totalorder %s18, 1
      %p81 = por %p79, %p80
      %p83 = scmp.ne.s32.totalorder %s66, %s82
      %p84 = scmp.eq.s32.totalorder %s18, 0
      %p85 = por %p83, %p84
      %s86 = ssub.s32 %s19, %s31
      %s87 = ssub.s32 %s20, %s27
      %s88 = sor.u32 %s86, %s87
      %p89 = scmp.eq.s32.totalorder %s88, 0
      %s91 = sadd.s32 %s90, 1
      %s92 = scalar_select %p89, %s90, %s91
      %p95 = pneg %p89
      %p96 = scmp.eq.s32.totalorder %s12, 1
      %p97 = por %p95, %p96
      %p98 = scmp.ne.s32.totalorder %s90, %s93
      %p99 = scmp.eq.s32.totalorder %s12, 0
      %p100 = por %p98, %p99
      %p101 = scmp.ne.s32.totalorder %s90, %s93
      %p102 = scmp.eq.s32.totalorder %s17, 1
      %p103 = por %p101, %p102
      %p104 = scmp.ne.s32.totalorder %s93, %s94
      %p105 = scmp.eq.s32.totalorder %s17, 0
      %p106 = por %p104, %p105
      %p107 = scmp.ne.s32.totalorder %s93, %s94
      %p108 = scmp.eq.s32.totalorder %s18, 1
      %p109 = por %p107, %p108
      %p111 = scmp.ne.s32.totalorder %s94, %s110
      %p112 = scmp.eq.s32.totalorder %s18, 0
      %p113 = por %p111, %p112
      %p114 = scmp.le.s32.totalorder 1, %s12
      %p115 = scmp.lt.s32.totalorder %s12, 3
      %p116 = pnand %p114, %p115
      %p117 = pneg %p116
      // Predicated region
      $region9: #{tpu_custom_call.1} parent=5 // pred_check
        _
      $region10: #{tpu_custom_call.1} parent=5 // pred_check_branch
        %119 = sbr.rel (%p116) target = $region12
      $region11: #{tpu_custom_call.1} parent=5 // pred_region
        %s120 = ssub.s32 %s12, 1
        // Predicated region
        $region13: #{tpu_custom_call.1} parent=11 // pred_check
          %p121 = pneg %p78
        $region14: #{tpu_custom_call.1} parent=11 // pred_check_branch
          %123 = sbr.rel (%p121) target = $region16
        $region15: #{tpu_custom_call.1} parent=11 // pred_region
          %s125 = ssub.s32 128, 128
          %126 = vsyncadd [#allocation5], %s125
          %s127 = smul.addr %s21, 128
          %s128 = scalar_lea.hbm %s1, %s127
          %s130 = sshll.u32 [#allocation4], 4
          %s131 = int_to_ptr.vmem [resolvable:$true] %s130
          %133 = dma.hbm_to_vmem [thread:$0]  %s128, 128, %s131, [#allocation5]
        $region16: #{tpu_custom_call.1} parent=11 // pred_fallthru
          _
      $region12: #{tpu_custom_call.1} parent=5 // pred_fallthru
        _
      %p134 = scmp.lt.s32.totalorder %s12, 2
      // Predicated region
      $region17: #{tpu_custom_call.1} parent=5 // pred_check
        %p135 = pneg %p134
      $region18: #{tpu_custom_call.1} parent=5 // pred_check_branch
        %137 = sbr.rel (%p135) target = $region20
      $region19: #{tpu_custom_call.1} parent=5 // pred_region
        // Predicated region
        $region21: #{tpu_custom_call.1} parent=19 // pred_check
          %p138 = pneg %p46
        $region22: #{tpu_custom_call.1} parent=19 // pred_check_branch
          %140 = sbr.rel (%p138) target = $region24
        $region23: #{tpu_custom_call.1} parent=19 // pred_region
          %s141 = sand.u32 %s36, 1
          %s142 = scalar_lea.sflag [#allocation3], %s141
          %s143 = sand.u32 %s36, 1
          %s144 = smul.addr %s143, 8
          %s145 = scalar_lea.vmem [#allocation2], %s144
          %s147 = ssub.s32 128, 128
          %148 = vsyncadd %s142, %s147
          %s149 = sadd.s32 %s19, %s20
          %s150 = smul.addr %s149, 128
          %s151 = scalar_lea.hbm %s0, %s150
          %s153 = sshll.u32 %s145, 4
          %s154 = int_to_ptr.vmem [resolvable:$true] %s153
          %156 = dma.hbm_to_vmem [thread:$0]  %s151, 128, %s154, %s142
        $region24: #{tpu_custom_call.1} parent=19 // pred_fallthru
          _
      $region20: #{tpu_custom_call.1} parent=5 // pred_fallthru
        _
      %p157 = scmp.le.s32.totalorder 1, %s12
      %p158 = scmp.lt.s32.totalorder %s12, 3
      %p159 = pnand %p157, %p158
      %p160 = pneg %p159
      // Predicated region
      $region25: #{tpu_custom_call.1} parent=5 // pred_check
        _
      $region26: #{tpu_custom_call.1} parent=5 // pred_check_branch
        %162 = sbr.rel (%p159) target = $region28
      $region27: #{tpu_custom_call.1} parent=5 // pred_region
        %s163 = ssub.s32 %s12, 1
        %s164 = sand.u32 %s39, 1
        %s165 = scalar_lea.sflag [#allocation3], %s164
        %s166 = sand.u32 %s39, 1
        %s167 = smul.addr %s166, 8
        %s168 = scalar_lea.vmem [#allocation2], %s167
        // Predicated region
        $region29: #{tpu_custom_call.1} parent=27 // pred_check
          %p169 = pneg %p52
        $region30: #{tpu_custom_call.1} parent=27 // pred_check_branch
          %171 = sbr.rel (%p169) target = $region32
        $region31: #{tpu_custom_call.1} parent=27 // pred_region
          %172 = dma.done %s165, 128
        $region32: #{tpu_custom_call.1} parent=27 // pred_fallthru
          _
        // Predicated region
        $region33: #{tpu_custom_call.1} parent=27 // pred_check
          %p173 = pneg %p78
        $region34: #{tpu_custom_call.1} parent=27 // pred_check_branch
          %175 = sbr.rel (%p173) target = $region36
        $region35: #{tpu_custom_call.1} parent=27 // pred_region
          %176 = dma.done [#allocation5], 128
        $region36: #{tpu_custom_call.1} parent=27 // pred_fallthru
          _
        %s177 = sand.u32 %s39, 1
        %s178 = scalar_lea.sflag [#allocation3], %s177
        %s179 = sand.u32 %s39, 1
        %s180 = smul.addr %s179, 8
        %s181 = scalar_lea.vmem [#allocation2], %s180
        %p182 = pneg %p52
        %p183 = pneg %p49
        %p184 = pneg %p78
        %p185 = pneg %p75
        %p186 = pneg %p106
        %p187 = pneg %p103
        %p188 = scmp.lt.s32.totalorder %s21, 0
        %s189 = scalar_select %p188, %s21, 0
        %p190 = scmp.lt.s32.totalorder %s22, 1
        %s191 = scalar_select %p190, %s22, 1
        %s192 = smul.addr %s189, 2
        %s193 = sadd.s32 %s191, %s192
        %s194 = scalar_lea.vmem %s2, %s193
        %p195 = scmp.lt.s32.totalorder %s21, 0
        %s196 = scalar_select %p195, %s21, 0
        %p197 = scmp.lt.s32.totalorder %s22, 1
        %s198 = scalar_select %p197, %s22, 1
        %s199 = smul.addr %s196, 2
        %s200 = sadd.s32 %s198, %s199
        %s201 = scalar_lea.vmem %s2, %s200
        %v202 = vld [vmem:[%s168] sm:$0xff]
        %v203 = vmul.f32 %v202, %v202
        %v204 = vadd.f32 %v203, 0.0
        %v205 = vld [vmem:[#allocation4] sm:$0xff]
        %v206 = vmul.f32 %v204, %v205
        %vm207 = vcmask 64512
        %v208 = vsel %vm207, %v206, 0.0
        %209 = vadd.xlane.f32.xlu0 %v208
        %v210 = vpop.xlane.xlu0 %209
        %v211 = vrot.slane %v210, 4
        %v212 = vadd.f32 %v210, %v211
        %v213 = vrot.slane %v212, 2
        %v214 = vadd.f32 %v212, %v213
        %v215 = vrot.slane %v214, 1
        %v216 = vadd.f32 %v214, %v215
        %s217 = vtos %v216
        %v218 = vstv %s217
        %vm219 = vcmask 0
        %220 = vst.msk [vmem:[%s201] sm:$0x1] %vm219, %v218
        %p221 = scmp.lt.s32.totalorder %s21, 0
        %s222 = scalar_select %p221, %s21, 0
        %p223 = scmp.lt.s32.totalorder %s22, 1
        %s224 = scalar_select %p223, %s22, 1
        %s225 = smul.addr %s222, 2
        %s226 = sadd.s32 %s224, %s225
        %s227 = scalar_lea.vmem %s2, %s226
        // Predicated region
        $region37: #{tpu_custom_call.1} parent=27 // pred_check
          %p228 = pneg %p103
        $region38: #{tpu_custom_call.1} parent=27 // pred_check_branch
          %230 = sbr.rel (%p228) target = $region40
        $region39: #{tpu_custom_call.1} parent=27 // pred_region
          _
        $region40: #{tpu_custom_call.1} parent=27 // pred_fallthru
          _
      $region28: #{tpu_custom_call.1} parent=5 // pred_fallthru
        _
      %p231 = scmp.le.s32.totalorder 2, %s12
      // Predicated region
      $region41: #{tpu_custom_call.1} parent=5 // pred_check
        %p232 = pneg %p231
      $region42: #{tpu_custom_call.1} parent=5 // pred_check_branch
        %234 = sbr.rel (%p232) target = $region44
      $region43: #{tpu_custom_call.1} parent=5 // pred_region
        %s235 = ssub.s32 %s12, 2
        // Predicated region
        $region45: #{tpu_custom_call.1} parent=43 // pred_check
          %p236 = pneg %p109
        $region46: #{tpu_custom_call.1} parent=43 // pred_check_branch
          %238 = sbr.rel (%p236) target = $region48
        $region47: #{tpu_custom_call.1} parent=43 // pred_region
          %p239 = scmp.lt.s32.totalorder %s23, 0
          %s240 = scalar_select %p239, %s23, 0
          %p241 = scmp.lt.s32.totalorder %s24, 1
          %s242 = scalar_select %p241, %s24, 1
          %s243 = smul.addr %s240, 2
          %s244 = sadd.s32 %s242, %s243
          %s245 = scalar_lea.vmem %s2, %s244
        $region48: #{tpu_custom_call.1} parent=43 // pred_fallthru
          _
      $region44: #{tpu_custom_call.1} parent=5 // pred_fallthru
        _
    $region6: #{tpu_custom_call.1} parent=1 // loop_footer
      %s16 = sadd.s32 1, %s12
    $region7: #{tpu_custom_call.1} parent=1 // loop_footer_branch
      %11 = sbr.rel target = $region3
    $region8: #{tpu_custom_call.1} parent=1 // loop_exit
      _
    %246 = vsyncpa [#allocation3], 1
    %s247 = scalar_lea.sflag [#allocation3], 1
    %248 = vsyncpa %s247, 1
    %249 = vsyncpa [#allocation5], 1

</llo_original>
